<compile_context>
chip_gen: v7x
topology: tpu7x:2x2x1
jax: 0.10.0
libtpu: 0.0.40
codegen_flags: <defaults>
</compile_context>

<pallas_src>
import math

import jax
import jax.numpy as jnp
from jax import lax
from jax.experimental import pallas as pl
from jax.experimental.pallas import tpu as pltpu

SQRT2 = math.sqrt(2.0)


# ----------------------------------------------------------------------------
# helpers
# ----------------------------------------------------------------------------
def _round_up(n, m):
    return ((n + m - 1) // m) * m


def _pick_tile_p(P, cin, mid, hcp, budget_bytes=40 * 1024 * 1024, max_tile=4096):
    """Largest lane-friendly pixel tile (multiple of 128) dividing P whose
    double-buffered pipelined blocks + f32 compute temps fit an explicit VMEM
    byte budget (v7x: 64 MiB physical per TC; v5e/v6e: 128 MiB)."""
    if P <= 128 or P % 128 != 0:
        return P                       # single full-extent block (legal BlockSpec)
    # per-batch weight set, bf16, double-buffered by the pipeline
    w_bytes = 2 * 2 * (mid * cin + mid * mid + hcp * mid)

    def tile_bytes(t):
        io = (cin * 2       # x bf16
              + 2 * 4       # noise rows f32
              + mid * 2     # h out bf16
              + hcp * 4)    # o out f32
        temps = 3 * mid * 4            # f32 (mid, t) compute temporaries
        return 2 * io * t + temps * t + w_bytes

    t = 128
    while (t * 2 <= max_tile and P % (t * 2) == 0
           and tile_bytes(t * 2) <= budget_bytes):
        t *= 2
    return t


def _modulate(w, s, *, demod):
    """StyleGAN2-style weight (de)modulation, precomputed on host in f32.

    w: (Cout, Cin) shared 1x1 weight (equalized-lr scale baked in).
    s: (B, Cin) per-batch style scales.
    returns (B, Cout, Cin).
    """
    wm = w[None, :, :] * s[:, None, :]
    if demod:
        d = lax.rsqrt(jnp.sum(wm * wm, axis=2, keepdims=True) + 1e-8)
        wm = wm * d
    return wm


# ----------------------------------------------------------------------------
# Fused Pallas kernel: conv1/noise1/act1 -> conv2/noise2/act2 -> fused heads
# ----------------------------------------------------------------------------
def _synth_kernel(x_ref, w1_ref, w2_ref, wh_ref,
                  b1_ref, b2_ref, bh_ref, nz_ref,
                  h_ref, o_ref):
    # x_ref : (1, Cin, TILE_P) bf16    input pixels, channels-first
    # w1_ref: (1, mid, Cin)    bf16    per-batch modulated+demodulated conv1 weight
    # w2_ref: (1, mid, mid)    bf16    conv2 weight (act1 sqrt(2) gain pre-folded)
    # wh_ref: (1, HCp, mid)    bf16    all head weights (modulated, no demod,
    #                                  act2 sqrt(2) gain pre-folded), concatenated
    # b1/b2 : (mid, 1) f32, bh: (HCp, 1) f32
    # nz_ref: (1, 2, TILE_P) f32       per-pixel noise, pre-scaled by NoiseInjection
    #                                  weights (row 0 -> conv1, row 1 -> conv2)
    # h_ref : (1, mid, TILE_P) bf16    activation after conv2/act2 (returned `h`)
    # o_ref : (1, HCp, TILE_P) f32     concatenated head outputs

    # ---- conv1 (modulated 1x1, bf16 MXU, f32 accum) + noise1 + bias + LeakyReLU
    #      (FusedLeakyReLU's sqrt(2) gain is folded into w2m on the host)
    y = jnp.dot(w1_ref[0], x_ref[0], preferred_element_type=jnp.float32)   # (mid, tp)
    y = y + nz_ref[0, 0:1, :] + b1_ref[...]
    y = jnp.maximum(y, 0.2 * y)

    # ---- conv2 + noise2 + bias + LeakyReLU (intermediate never leaves VMEM;
    #      act2's sqrt(2) gain is folded into the head weights and applied
    #      explicitly only on the h store)
    y = jnp.dot(w2_ref[0], y.astype(jnp.bfloat16),
                preferred_element_type=jnp.float32)                        # (mid, tp)
    y = y + nz_ref[0, 1:2, :] + b2_ref[...]
    y = jnp.maximum(y, 0.2 * y)

    h_ref[0] = (y * SQRT2).astype(h_ref.dtype)

    # ---- all ToX heads fused into one matmul (demod=False) + bias, no activation
    o = jnp.dot(wh_ref[0], y.astype(jnp.bfloat16),
                preferred_element_type=jnp.float32)                        # (HCp, tp)
    o_ref[0] = (o + bh_ref[...]).astype(o_ref.dtype)


def _fused_synthesis(x, w1m, w2m, whm, b1, b2, bh, nz):
    """x: (B,Cin,P) bf16; w*: per-batch bf16 weights; b*: f32 biases;
    nz: (B,2,P) f32 pre-scaled noise. Returns (h bf16, o f32), both (B,C,P)."""
    B, cin, P = x.shape
    mid = w1m.shape[1]
    hcp = whm.shape[1]
    tile_p = _pick_tile_p(P, cin, mid, hcp)
    n_pt = P // tile_p

    return pl.pallas_call(
        _synth_kernel,
        out_shape=(jax.ShapeDtypeStruct((B, mid, P), jnp.bfloat16),
                   jax.ShapeDtypeStruct((B, hcp, P), jnp.float32)),
        grid=(B, n_pt),
        in_specs=[
            pl.BlockSpec((1, cin, tile_p), lambda b, p: (b, 0, p)),
            pl.BlockSpec((1, mid, cin), lambda b, p: (b, 0, 0)),
            pl.BlockSpec((1, mid, mid), lambda b, p: (b, 0, 0)),
            pl.BlockSpec((1, hcp, mid), lambda b, p: (b, 0, 0)),
            pl.BlockSpec((mid, 1), lambda b, p: (0, 0)),
            pl.BlockSpec((mid, 1), lambda b, p: (0, 0)),
            pl.BlockSpec((hcp, 1), lambda b, p: (0, 0)),
            pl.BlockSpec((1, 2, tile_p), lambda b, p: (b, 0, p)),
        ],
        out_specs=(
            pl.BlockSpec((1, mid, tile_p), lambda b, p: (b, 0, p)),
            pl.BlockSpec((1, hcp, tile_p), lambda b, p: (b, 0, p)),
        ),
        compiler_params=pltpu.CompilerParams(
            dimension_semantics=("parallel", "parallel"),
            vmem_limit_bytes=56 * 1024 * 1024,
        ),
    )(x, w1m, w2m, whm, b1, b2, bh, nz)


# ----------------------------------------------------------------------------
# Plain-JAX glue: ops.Resample (upfirdn up=2, window [1,3,3,1], ring pad in W)
# and ops.FourierFeature positional encoding.
# ----------------------------------------------------------------------------
def resample_up2(x, window=(1.0, 3.0, 3.0, 1.0), ring=True):
    """ops.Resample(up=2, window=[1,3,3,1], direction='hw').

    Uses lhs_dilation (implicit zero-stuffing inside the conv) instead of an
    explicit 4x zero-stuffed intermediate; the ring pad in W becomes a single
    one-column wrap before dilation, the zero pad in H becomes conv edge pad.
    Matches upfirdn2d(up=2, pad=(2,1)) for this window/up exactly.
    """
    B, C, H, W = x.shape
    k1 = jnp.asarray(window, jnp.float32)
    k1 = k1 / jnp.sum(k1)
    up = 2
    kw = k1.shape[0]                              # 4
    k2 = (jnp.outer(k1, k1) * float(up * up)).astype(x.dtype)
    p = kw - up                                   # 2
    pad0 = (p + 1) // 2 + up - 1                  # 2   (dilated-lattice low pad)
    pad1 = p // 2 + up - 1                        # 2   (high pad incl. trailing stuffed zero)
    if ring:
        # wrap one source column per side: after dilation this reproduces
        # upfirdn's [x[-1], 0 | ... | 0, x[0]] padded sequence in W.
        x = jnp.concatenate([x[:, :, :, -1:], x, x[:, :, :, :1]], axis=3)
        w_pad = (0, 0)
    else:
        w_pad = (pad0, pad1)
    kern = jnp.broadcast_to(k2, (C, 1, kw, kw))
    return lax.conv_general_dilated(
        x, kern, window_strides=(1, 1),
        padding=((pad0, pad1), w_pad),
        lhs_dilation=(up, up),
        feature_group_count=C,
        dimension_numbers=("NCHW", "OIHW", "NCHW"))


def fourier_feature(angle, basis):
    # TODO(synk): ops.FourierFeature('random', L_offset) internals approximated by a
    # fixed Gaussian basis; out_ch = 2 * num_freqs (sin/cos), matching concat order.
    proj = jnp.einsum("fc,bchw->bfhw", basis, angle)
    return jnp.concatenate([jnp.sin(proj), jnp.cos(proj)], axis=1)


# ----------------------------------------------------------------------------
# Parameter construction (deterministic, matches the module's __init__ shapes)
# ----------------------------------------------------------------------------
def init_params(key, in_ch, mid_ch, mod_ch, num_freqs, heads_cfg):
    pe_out = 2 * num_freqs
    cin1 = in_ch + pe_out
    ks = jax.random.split(key, 6)
    params = {
        "pe_basis": jax.random.normal(ks[0], (num_freqs, 2), jnp.float32),
        # conv1: ModConv2d(in_ch + pe_ch -> mid_ch, ksize=1, bias=False);
        # weights stored (Cout, Cin) with equalized-lr scale baked in.
        "aff1_w": jax.random.normal(ks[1], (mod_ch, cin1), jnp.float32) / math.sqrt(mod_ch),
        "aff1_b": jnp.ones((cin1,), jnp.float32),
        "conv1_w": jax.random.normal(ks[2], (mid_ch, cin1), jnp.float32) / math.sqrt(cin1),
        "noise1_w": jnp.zeros((), jnp.float32),          # NoiseInjection init = 0
        "act1_b": jnp.zeros((mid_ch,), jnp.float32),     # FusedLeakyReLU bias
        # conv2: ModConv2d(mid_ch -> mid_ch)
        "aff2_w": jax.random.normal(ks[3], (mod_ch, mid_ch), jnp.float32) / math.sqrt(mod_ch),
        "aff2_b": jnp.ones((mid_ch,), jnp.float32),
        "conv2_w": jax.random.normal(ks[4], (mid_ch, mid_ch), jnp.float32) / math.sqrt(mid_ch),
        "noise2_w": jnp.zeros((), jnp.float32),
        "act2_b": jnp.zeros((mid_ch,), jnp.float32),
        "heads": {},
    }
    hkeys = jax.random.split(ks[5], 2 * len(heads_cfg))
    for i, cfg in enumerate(heads_cfg):
        if cfg["ch"] == 0:
            continue
        params["heads"][cfg["name"]] = {
            "aff_w": jax.random.normal(hkeys[2 * i], (mod_ch, mid_ch), jnp.float32)
                     / math.sqrt(mod_ch),
            "aff_b": jnp.ones((mid_ch,), jnp.float32),
            "w": jax.random.normal(hkeys[2 * i + 1], (cfg["ch"], mid_ch), jnp.float32)
                 / math.sqrt(mid_ch),
            "b": jnp.zeros((cfg["ch"],), jnp.float32),
        }
    return params


# ----------------------------------------------------------------------------
# SynthesisBlock.forward (non-first block, use_pe=True, use_noise=True, up=2)
# ----------------------------------------------------------------------------
def synthesis_block_forward(params, h, skip, ws, angle, noise_seed=0):
    # TODO(synk): torch.cuda.amp autocast / fp16 path omitted (use_fp16=False);
    # bf16 is used for MXU matmul inputs and the returned h; head outputs and
    # the skip-add stay f32.
    B, _, H, W = angle.shape
    P = H * W
    ws_it = iter(ws)

    # resample(h) + Fourier PE concat, cast to bf16 *before* the concat so the
    # wrapper never materializes a full f32 activation copy.
    h = resample_up2(h, ring=True)                        # (B, in_ch, H, W)
    h_pe = fourier_feature(angle, params["pe_basis"])     # (B, 2F, H, W)
    x = jnp.concatenate([h.astype(jnp.bfloat16), h_pe.astype(jnp.bfloat16)], axis=1)
    cin = x.shape[1]
    # channels-first, pixels-on-lanes layout: NCHW -> (B, C, P) is a free reshape
    x = x.reshape(B, cin, P)

    mid = params["conv1_w"].shape[0]

    # per-batch modulated (and demodulated) 1x1 weights, precomputed in f32.
    # The FusedLeakyReLU sqrt(2) gains are folded in here (after demodulation):
    # act1's gain into w2m, act2's gain into the head weights.
    w_style1 = next(ws_it)
    w_style2 = next(ws_it)
    w_style_h = next(ws_it)
    s1 = w_style1 @ params["aff1_w"] + params["aff1_b"]              # (B, Cin)
    s2 = w_style2 @ params["aff2_w"] + params["aff2_b"]              # (B, mid)
    w1m = _modulate(params["conv1_w"], s1, demod=True).astype(jnp.bfloat16)
    w2m = (_modulate(params["conv2_w"], s2, demod=True) * SQRT2).astype(jnp.bfloat16)

    head_names, head_chs, wh_list, bh_list = [], [], [], []
    for name, hp in params["heads"].items():
        s_h = w_style_h @ hp["aff_w"] + hp["aff_b"]                  # (B, mid)
        wh_list.append(_modulate(hp["w"], s_h, demod=False))         # (B, ch, mid)
        bh_list.append(hp["b"])
        head_names.append(name)
        head_chs.append(hp["w"].shape[0])
    whm = jnp.concatenate(wh_list, axis=1) * SQRT2                   # (B, HC, mid)
    bh = jnp.concatenate(bh_list, axis=0)                            # (HC,)
    hc = whm.shape[1]
    hcp = _round_up(hc, 8)               # pad heads to a sublane multiple
    whm = jnp.pad(whm, ((0, 0), (0, hcp - hc), (0, 0))).astype(jnp.bfloat16)
    bh = jnp.pad(bh, (0, hcp - hc))[:, None]                         # (HCp, 1)

    b1 = params["act1_b"][:, None]                                   # (mid, 1)
    b2 = params["act2_b"][:, None]

    # NoiseInjection: per-pixel N(0,1) broadcast over channels, pre-scaled by the
    # (scalar) noise weights.  Generated in the wrapper (interpreter-safe); tiny
    # (B, 2, P) lane-dense tensor.
    nw = jnp.stack([params["noise1_w"], params["noise2_w"]]).reshape(1, 2, 1)
    nz = nw * jax.random.normal(jax.random.PRNGKey(noise_seed), (B, 2, P), jnp.float32)

    # single fused Pallas kernel: conv1/noise1/act1 -> conv2/noise2/act2 -> heads
    h_flat, o_flat = _fused_synthesis(x, w1m, w2m, whm, b1, b2, bh, nz)

    h_out = h_flat.reshape(B, mid, H, W)                             # bf16

    o = {}
    off = 0
    for name, ch in zip(head_names, head_chs):
        y = o_flat[:, off:off + ch, :].reshape(B, ch, H, W)          # f32
        if skip is not None:
            y = y + resample_up2(skip[name], ring=True)              # f32 skip-add
        o[name] = y
        off += ch
    return h_out, o


# ----------------------------------------------------------------------------
if __name__ == "__main__":
    B, in_ch, mid_ch, mod_ch = 2, 4, 32, 32
    H, W = 16, 16
    num_freqs = 8
    heads_cfg = [{"name": "depth", "ch": 1}, {"name": "mask", "ch": 1}]

    root = jax.random.PRNGKey(0)
    kp, kh, ks1, ks2, kw1, kw2, kw3, ka = jax.random.split(root, 8)

    params = init_params(kp, in_ch, mid_ch, mod_ch, num_freqs, heads_cfg)

    h = jax.random.normal(kh, (B, in_ch, H // 2, W // 2), jnp.float32)
    skip = {
        "depth": jax.random.normal(ks1, (B, 1, H // 2, W // 2), jnp.float32),
        "mask": jax.random.normal(ks2, (B, 1, H // 2, W // 2), jnp.float32),
    }
    ws = [jax.random.normal(k, (B, mod_ch), jnp.float32) for k in (kw1, kw2, kw3)]
    angle = jax.random.normal(ka, (B, 2, H, W), jnp.float32)

    h_out, o = synthesis_block_forward(params, h, skip, ws, angle, noise_seed=1234)

    h_out = jax.block_until_ready(h_out)
    for k in o:
        o[k] = jax.block_until_ready(o[k])

    assert h_out.shape == (B, mid_ch, H, W) and h_out.dtype == jnp.bfloat16
    assert o["depth"].shape == (B, 1, H, W) and o["depth"].dtype == jnp.float32
    assert o["mask"].shape == (B, 1, H, W) and o["mask"].dtype == jnp.float32
    assert bool(jnp.isfinite(h_out.astype(jnp.float32)).all())
    assert all(bool(jnp.isfinite(v).all()) for v in o.values())
    print("KERNEL_OK")
</pallas_src>

<mosaic_0001>
module attributes {stable_mosaic.version = 11 : i64} {
  func.func @_synth_kernel(%arg0: i32, %arg1: i32, %arg2: memref<1x20x256xbf16, #tpu.memory_space<vmem>>, %arg3: memref<1x32x20xbf16, #tpu.memory_space<vmem>>, %arg4: memref<1x32x32xbf16, #tpu.memory_space<vmem>>, %arg5: memref<1x8x32xbf16, #tpu.memory_space<vmem>>, %arg6: memref<32x1xf32, #tpu.memory_space<vmem>>, %arg7: memref<32x1xf32, #tpu.memory_space<vmem>>, %arg8: memref<8x1xf32, #tpu.memory_space<vmem>>, %arg9: memref<1x2x256xf32, #tpu.memory_space<vmem>>, %arg10: memref<1x32x256xbf16, #tpu.memory_space<vmem>>, %arg11: memref<1x8x256xf32, #tpu.memory_space<vmem>>) attributes {dimension_semantics = [#tpu.dimension_semantics<parallel>, #tpu.dimension_semantics<parallel>], iteration_bounds = array<i64: 2, 1>, scalar_prefetch = 0 : i64, scratch_operands = 0 : i64, tpu.core_type = #tpu.core_type<tc>, window_params = [{transform_indices = @transform_0, window_bounds = array<i64: 1, 20, 256>}, {transform_indices = @transform_1, window_bounds = array<i64: 1, 32, 20>}, {transform_indices = @transform_2, window_bounds = array<i64: 1, 32, 32>}, {transform_indices = @transform_3, window_bounds = array<i64: 1, 8, 32>}, {pipeline_mode = #tpu.pipeline_mode<synchronous>, transform_indices = @transform_4, window_bounds = array<i64: 32, 1>}, {pipeline_mode = #tpu.pipeline_mode<synchronous>, transform_indices = @transform_5, window_bounds = array<i64: 32, 1>}, {pipeline_mode = #tpu.pipeline_mode<synchronous>, transform_indices = @transform_6, window_bounds = array<i64: 8, 1>}, {transform_indices = @transform_7, window_bounds = array<i64: 1, 2, 256>}, {transform_indices = @transform_8, window_bounds = array<i64: 1, 32, 256>}, {transform_indices = @transform_9, window_bounds = array<i64: 1, 8, 256>}]} {
    %c0 = arith.constant 0 : index
    %c0_0 = arith.constant 0 : index
    %c0_1 = arith.constant 0 : index
    %0 = vector.load %arg3[%c0, %c0_0, %c0_1] : memref<1x32x20xbf16, #tpu.memory_space<vmem>>, vector<1x32x20xbf16>
    %1 = vector.shape_cast %0 : vector<1x32x20xbf16> to vector<32x20xbf16>
    %c0_2 = arith.constant 0 : index
    %c0_3 = arith.constant 0 : index
    %c0_4 = arith.constant 0 : index
    %2 = vector.load %arg2[%c0_2, %c0_3, %c0_4] : memref<1x20x256xbf16, #tpu.memory_space<vmem>>, vector<1x20x256xbf16>
    %3 = vector.shape_cast %2 : vector<1x20x256xbf16> to vector<20x256xbf16>
    %cst = arith.constant dense<0.000000e+00> : vector<32x256xf32>
    %4 = tpu.matmul %1, %3, %cst {dimension_numbers = #tpu.dot_dimension_numbers<[1], [0], [0], [1], [0, 0, 1, 1], [], []>} : vector<32x20xbf16>, vector<20x256xbf16>, vector<32x256xf32> -> vector<32x256xf32>
    %c0_5 = arith.constant 0 : index
    %c0_6 = arith.constant 0 : index
    %c0_7 = arith.constant 0 : index
    %5 = vector.load %arg9[%c0_5, %c0_6, %c0_7] : memref<1x2x256xf32, #tpu.memory_space<vmem>>, vector<1x1x256xf32>
    %6 = vector.shape_cast %5 : vector<1x1x256xf32> to vector<1x256xf32>
    %7 = vector.broadcast %6 : vector<1x256xf32> to vector<32x256xf32>
    %8 = arith.addf %4, %7 : vector<32x256xf32>
    %c0_8 = arith.constant 0 : index
    %c0_9 = arith.constant 0 : index
    %9 = vector.load %arg6[%c0_8, %c0_9] : memref<32x1xf32, #tpu.memory_space<vmem>>, vector<32x1xf32>
    %10 = vector.broadcast %9 : vector<32x1xf32> to vector<32x256xf32>
    %11 = arith.addf %8, %10 : vector<32x256xf32>
    %cst_10 = arith.constant 2.000000e-01 : f32
    %12 = vector.broadcast %cst_10 : f32 to vector<32x256xf32>
    %13 = arith.mulf %12, %11 : vector<32x256xf32>
    %14 = arith.maximumf %11, %13 : vector<32x256xf32>
    %c0_11 = arith.constant 0 : index
    %c0_12 = arith.constant 0 : index
    %c0_13 = arith.constant 0 : index
    %15 = vector.load %arg4[%c0_11, %c0_12, %c0_13] : memref<1x32x32xbf16, #tpu.memory_space<vmem>>, vector<1x32x32xbf16>
    %16 = vector.shape_cast %15 : vector<1x32x32xbf16> to vector<32x32xbf16>
    %17 = arith.truncf %14 : vector<32x256xf32> to vector<32x256xbf16>
    %cst_14 = arith.constant dense<0.000000e+00> : vector<32x256xf32>
    %18 = tpu.matmul %16, %17, %cst_14 {dimension_numbers = #tpu.dot_dimension_numbers<[1], [0], [0], [1], [0, 0, 1, 1], [], []>} : vector<32x32xbf16>, vector<32x256xbf16>, vector<32x256xf32> -> vector<32x256xf32>
    %c0_15 = arith.constant 0 : index
    %c1 = arith.constant 1 : index
    %c0_16 = arith.constant 0 : index
    %19 = vector.load %arg9[%c0_15, %c1, %c0_16] : memref<1x2x256xf32, #tpu.memory_space<vmem>>, vector<1x1x256xf32>
    %20 = vector.shape_cast %19 : vector<1x1x256xf32> to vector<1x256xf32>
    %21 = vector.broadcast %20 : vector<1x256xf32> to vector<32x256xf32>
    %22 = arith.addf %18, %21 : vector<32x256xf32>
    %c0_17 = arith.constant 0 : index
    %c0_18 = arith.constant 0 : index
    %23 = vector.load %arg7[%c0_17, %c0_18] : memref<32x1xf32, #tpu.memory_space<vmem>>, vector<32x1xf32>
    %24 = vector.broadcast %23 : vector<32x1xf32> to vector<32x256xf32>
    %25 = arith.addf %22, %24 : vector<32x256xf32>
    %cst_19 = arith.constant 2.000000e-01 : f32
    %26 = vector.broadcast %cst_19 : f32 to vector<32x256xf32>
    %27 = arith.mulf %26, %25 : vector<32x256xf32>
    %28 = arith.maximumf %25, %27 : vector<32x256xf32>
    %cst_20 = arith.constant 1.41421354 : f32
    %29 = vector.broadcast %cst_20 : f32 to vector<32x256xf32>
    %30 = arith.mulf %28, %29 : vector<32x256xf32>
    %31 = arith.truncf %30 : vector<32x256xf32> to vector<32x256xbf16>
    %c0_21 = arith.constant 0 : index
    %c0_22 = arith.constant 0 : index
    %c0_23 = arith.constant 0 : index
    %32 = vector.load %arg10[%c0_21, %c0_22, %c0_23] : memref<1x32x256xbf16, #tpu.memory_space<vmem>>, vector<1x32x256xbf16>
    %33 = vector.shape_cast %32 : vector<1x32x256xbf16> to vector<32x256xbf16>
    %34 = vector.shape_cast %31 : vector<32x256xbf16> to vector<1x32x256xbf16>
    tpu.vector_store %arg10[%c0_21, %c0_22, %c0_23], %34 {strides = array<i32>} : memref<1x32x256xbf16, #tpu.memory_space<vmem>>, vector<1x32x256xbf16>,
    %c0_24 = arith.constant 0 : index
    %c0_25 = arith.constant 0 : index
    %c0_26 = arith.constant 0 : index
    %35 = vector.load %arg5[%c0_24, %c0_25, %c0_26] : memref<1x8x32xbf16, #tpu.memory_space<vmem>>, vector<1x8x32xbf16>
    %36 = vector.shape_cast %35 : vector<1x8x32xbf16> to vector<8x32xbf16>
    %37 = arith.truncf %28 : vector<32x256xf32> to vector<32x256xbf16>
    %cst_27 = arith.constant dense<0.000000e+00> : vector<8x256xf32>
    %38 = tpu.matmul %36, %37, %cst_27 {dimension_numbers = #tpu.dot_dimension_numbers<[1], [0], [0], [1], [0, 0, 1, 1], [], []>} : vector<8x32xbf16>, vector<32x256xbf16>, vector<8x256xf32> -> vector<8x256xf32>
    %c0_28 = arith.constant 0 : index
    %c0_29 = arith.constant 0 : index
    %39 = vector.load %arg8[%c0_28, %c0_29] : memref<8x1xf32, #tpu.memory_space<vmem>>, vector<8x1xf32>
    %40 = vector.broadcast %39 : vector<8x1xf32> to vector<8x256xf32>
    %41 = arith.addf %38, %40 : vector<8x256xf32>
    %c0_30 = arith.constant 0 : index
    %c0_31 = arith.constant 0 : index
    %c0_32 = arith.constant 0 : index
    %42 = vector.load %arg11[%c0_30, %c0_31, %c0_32] : memref<1x8x256xf32, #tpu.memory_space<vmem>>, vector<1x8x256xf32>
    %43 = vector.shape_cast %42 : vector<1x8x256xf32> to vector<8x256xf32>
    %44 = vector.shape_cast %41 : vector<8x256xf32> to vector<1x8x256xf32>
    tpu.vector_store %arg11[%c0_30, %c0_31, %c0_32], %44 {strides = array<i32>} : memref<1x8x256xf32, #tpu.memory_space<vmem>>, vector<1x8x256xf32>,
    return
  }
  func.func @transform_0(%arg0: i32, %arg1: i32) -> (i32, i32, i32) {
    %c0_i32 = arith.constant 0 : i32
    %c0_i32_0 = arith.constant 0 : i32
    return %arg0, %c0_i32, %arg1 : i32, i32, i32
  }
  func.func @transform_1(%arg0: i32, %arg1: i32) -> (i32, i32, i32) {
    %c0_i32 = arith.constant 0 : i32
    %c0_i32_0 = arith.constant 0 : i32
    %c0_i32_1 = arith.constant 0 : i32
    return %arg0, %c0_i32, %c0_i32_0 : i32, i32, i32
  }
  func.func @transform_2(%arg0: i32, %arg1: i32) -> (i32, i32, i32) {
    %c0_i32 = arith.constant 0 : i32
    %c0_i32_0 = arith.constant 0 : i32
    %c0_i32_1 = arith.constant 0 : i32
    return %arg0, %c0_i32, %c0_i32_0 : i32, i32, i32
  }
  func.func @transform_3(%arg0: i32, %arg1: i32) -> (i32, i32, i32) {
    %c0_i32 = arith.constant 0 : i32
    %c0_i32_0 = arith.constant 0 : i32
    %c0_i32_1 = arith.constant 0 : i32
    return %arg0, %c0_i32, %c0_i32_0 : i32, i32, i32
  }
  func.func @transform_4(%arg0: i32, %arg1: i32) -> (i32, i32) {
    %c0_i32 = arith.constant 0 : i32
    %c0_i32_0 = arith.constant 0 : i32
    %c0_i32_1 = arith.constant 0 : i32
    return %c0_i32, %c0_i32_0 : i32, i32
  }
  func.func @transform_5(%arg0: i32, %arg1: i32) -> (i32, i32) {
    %c0_i32 = arith.constant 0 : i32
    %c0_i32_0 = arith.constant 0 : i32
    %c0_i32_1 = arith.constant 0 : i32
    return %c0_i32, %c0_i32_0 : i32, i32
  }
  func.func @transform_6(%arg0: i32, %arg1: i32) -> (i32, i32) {
    %c0_i32 = arith.constant 0 : i32
    %c0_i32_0 = arith.constant 0 : i32
    %c0_i32_1 = arith.constant 0 : i32
    return %c0_i32, %c0_i32_0 : i32, i32
  }
  func.func @transform_7(%arg0: i32, %arg1: i32) -> (i32, i32, i32) {
    %c0_i32 = arith.constant 0 : i32
    %c0_i32_0 = arith.constant 0 : i32
    return %arg0, %c0_i32, %arg1 : i32, i32, i32
  }
  func.func @transform_8(%arg0: i32, %arg1: i32) -> (i32, i32, i32) {
    %c0_i32 = arith.constant 0 : i32
    %c0_i32_0 = arith.constant 0 : i32
    return %arg0, %c0_i32, %arg1 : i32, i32, i32
  }
  func.func @transform_9(%arg0: i32, %arg1: i32) -> (i32, i32, i32) {
    %c0_i32 = arith.constant 0 : i32
    %c0_i32_0 = arith.constant 0 : i32
    return %arg0, %c0_i32, %arg1 : i32, i32, i32
  }
}

</mosaic_0001>

<llo_original>
// kernel: tpu_custom_call.1
$region0: #{tpu_custom_call.1}
  #allocation0 [shape = 'u32[]', space=smem, size = 0x4, offset = 0x4, fixed_abs, tag = 'smem constant byte address 0x4 - core index']
  #allocation1 [shape = 'u32[144,128]{1,0:T(1,128)}', space=vmem, size = 0x12000, scoped, tag = 'internal scratch']
  %s0 = inlined_call_operand.vmem [shape: bf16[2,20,256], index: 0, kind: input, shape index: {}]
  %s1 = inlined_call_operand.vmem [shape: bf16[2,32,20], index: 1, kind: input, shape index: {}]
  %s2 = inlined_call_operand.vmem [shape: bf16[2,32,32], index: 2, kind: input, shape index: {}]
  %s3 = inlined_call_operand.vmem [shape: bf16[2,8,32], index: 3, kind: input, shape index: {}]
  %s4 = inlined_call_operand.vmem [shape: f32[32,1], index: 4, kind: input, shape index: {}]
  %s5 = inlined_call_operand.vmem [shape: f32[32,1], index: 5, kind: input, shape index: {}]
  %s6 = inlined_call_operand.vmem [shape: f32[8,1], index: 6, kind: input, shape index: {}]
  %s7 = inlined_call_operand.vmem [shape: f32[2,2,256], index: 7, kind: input, shape index: {}]
  %s8 = inlined_call_operand.hbm [shape: bf16[2,32,256], index: 8, kind: output, shape index: {0}]
  %s9 = inlined_call_operand.hbm [shape: f32[2,8,256], index: 9, kind: output, shape index: {1}]
  %10 = xla_tuple %s8, %s9
  %s11 = sld [smem:[#allocation0]]
  $region73: #{tpu_custom_call.1} parent=0
    _
  %s13 = ssub.s32 1, %s11
  %s14 = scalar_select 0, %s13, %s11
  $region1: #{tpu_custom_call.1} parent=0
    #allocation2 [shape = 'u8[32768]{0}', space=vmem, size = 0x8000, scoped, tag = 'output window, operand 0']
    #allocation3 [shape = 's32[2]{0}', space=sflag, size = 0x8, scoped, tag = 'scoped memory for tpu_custom_call.1']
    #allocation4 [shape = 'u8[16384]{0}', space=vmem, size = 0x4000, scoped, tag = 'output window, operand 1']
    #allocation5 [shape = 's32[2]{0}', space=sflag, size = 0x8, scoped, tag = 'scoped memory for tpu_custom_call.1']
    %15 = vsyncpa [#allocation3], 0
    %s16 = scalar_lea.sflag [#allocation3], 1
    %17 = vsyncpa %s16, 0
    %18 = vsyncpa [#allocation5], 0
    %s19 = scalar_lea.sflag [#allocation5], 1
    %20 = vsyncpa %s19, 0
    loop: start=0, step=1, limit=4
    $region2: #{tpu_custom_call.1} parent=1 // loop_pre_header
      _
    $region3: #{tpu_custom_call.1} parent=1 // loop_header
      %s22 = sphi 0, %s26
      %p23 = scmp.ge.s32.totalorder %s22, 4
      %s29 = sphi 0, %s41
      %s30 = sphi 0, %s37
      %s31 = sphi 0, %s29
      %s32 = sphi 0, %s30
      %s33 = sphi 0, %s31
      %s34 = sphi 0, %s32
      %s46 = sphi 0, %s48
      %s49 = sphi 0, %s46
      %s50 = sphi 0, %s49
      %s66 = sphi 0, %s50
      %s72 = sphi 0, %s74
      %s75 = sphi 0, %s72
      %s76 = sphi 0, %s75
      %s92 = sphi 0, %s76
      %s98 = sphi 0, %s100
      %s101 = sphi 0, %s98
      %s102 = sphi 0, %s101
      %s118 = sphi 0, %s102
      %s124 = sphi 0, %s126
      %s127 = sphi 0, %s124
      %s128 = sphi 0, %s127
      %s144 = sphi 0, %s128
      %s148 = sphi 0, %s148
      %s150 = sphi 0, %s148
      %s151 = sphi 0, %s150
      %s165 = sphi 0, %s151
      %s169 = sphi 0, %s169
      %s171 = sphi 0, %s169
      %s172 = sphi 0, %s171
      %s186 = sphi 0, %s172
      %s190 = sphi 0, %s190
      %s192 = sphi 0, %s190
      %s193 = sphi 0, %s192
      %s207 = sphi 0, %s193
      %s215 = sphi 0, %s217
      %s218 = sphi 0, %s215
      %s219 = sphi 0, %s218
      %s235 = sphi 0, %s219
      %s243 = sphi 0, %s245
      %s246 = sphi 0, %s243
      %s247 = sphi 0, %s246
      %s263 = sphi 0, %s247
      %s271 = sphi 0, %s273
      %s274 = sphi 0, %s271
      %s275 = sphi 0, %s274
      %s291 = sphi 0, %s275
    $region4: #{tpu_custom_call.1} parent=1 // loop_header_branch
      %25 = sbr.rel (%p23) target = $region8
    $region5: #{tpu_custom_call.1} parent=1 // loop_body
      %s27 = ssub.s32 %s22, 1
      %s28 = ssub.s32 %s22, 2
      %s35 = sadd.s32 1, %s30
      %p36 = scmp.ge.s32.totalorder %s35, 1
      %s37 = scalar_select %p36, 0, %s35
      %s38 = sadd.s32 1, %s29
      %s39 = scalar_select %p36, %s38, %s29
      %p40 = scmp.ge.s32.totalorder %s39, 2
      %s41 = scalar_select %p40, 0, %s39
      %s42 = ssub.s32 %s29, %s41
      %s43 = ssub.s32 %s30, %s37
      %s44 = sor.u32 %s42, %s43
      %p45 = scmp.eq.s32.totalorder %s44, 0
      %s47 = sadd.s32 %s46, 1
      %s48 = scalar_select %p45, %s46, %s47
      %p51 = pneg %p45
      %p52 = scmp.eq.s32.totalorder %s22, 1
      %p53 = por %p51, %p52
      %p54 = scmp.ne.s32.totalorder %s46, %s49
      %p55 = scmp.eq.s32.totalorder %s22, 0
      %p56 = por %p54, %p55
      %p57 = scmp.ne.s32.totalorder %s46, %s49
      %p58 = scmp.eq.s32.totalorder %s27, 1
      %p59 = por %p57, %p58
      %p60 = scmp.ne.s32.totalorder %s49, %s50
      %p61 = scmp.eq.s32.totalorder %s27, 0
      %p62 = por %p60, %p61
      %p63 = scmp.ne.s32.totalorder %s49, %s50
      %p64 = scmp.eq.s32.totalorder %s28, 1
      %p65 = por %p63, %p64
      %p67 = scmp.ne.s32.totalorder %s50, %s66
      %p68 = scmp.eq.s32.totalorder %s28, 0
      %p69 = por %p67, %p68
      %s70 = ssub.s32 %s29, %s41
      %p71 = scmp.eq.s32.totalorder %s70, 0
      %s73 = sadd.s32 %s72, 1
      %s74 = scalar_select %p71, %s72, %s73
      %p77 = pneg %p71
      %p78 = scmp.eq.s32.totalorder %s22, 1
      %p79 = por %p77, %p78
      %p80 = scmp.ne.s32.totalorder %s72, %s75
      %p81 = scmp.eq.s32.totalorder %s22, 0
      %p82 = por %p80, %p81
      %p83 = scmp.ne.s32.totalorder %s72, %s75
      %p84 = scmp.eq.s32.totalorder %s27, 1
      %p85 = por %p83, %p84
      %p86 = scmp.ne.s32.totalorder %s75, %s76
      %p87 = scmp.eq.s32.totalorder %s27, 0
      %p88 = por %p86, %p87
      %p89 = scmp.ne.s32.totalorder %s75, %s76
      %p90 = scmp.eq.s32.totalorder %s28, 1
      %p91 = por %p89, %p90
      %p93 = scmp.ne.s32.totalorder %s76, %s92
      %p94 = scmp.eq.s32.totalorder %s28, 0
      %p95 = por %p93, %p94
      %s96 = ssub.s32 %s29, %s41
      %p97 = scmp.eq.s32.totalorder %s96, 0
      %s99 = sadd.s32 %s98, 1
      %s100 = scalar_select %p97, %s98, %s99
      %p103 = pneg %p97
      %p104 = scmp.eq.s32.totalorder %s22, 1
      %p105 = por %p103, %p104
      %p106 = scmp.ne.s32.totalorder %s98, %s101
      %p107 = scmp.eq.s32.totalorder %s22, 0
      %p108 = por %p106, %p107
      %p109 = scmp.ne.s32.totalorder %s98, %s101
      %p110 = scmp.eq.s32.totalorder %s27, 1
      %p111 = por %p109, %p110
      %p112 = scmp.ne.s32.totalorder %s101, %s102
      %p113 = scmp.eq.s32.totalorder %s27, 0
      %p114 = por %p112, %p113
      %p115 = scmp.ne.s32.totalorder %s101, %s102
      %p116 = scmp.eq.s32.totalorder %s28, 1
      %p117 = por %p115, %p116
      %p119 = scmp.ne.s32.totalorder %s102, %s118
      %p120 = scmp.eq.s32.totalorder %s28, 0
      %p121 = por %p119, %p120
      %s122 = ssub.s32 %s29, %s41
      %p123 = scmp.eq.s32.totalorder %s122, 0
      %s125 = sadd.s32 %s124, 1
      %s126 = scalar_select %p123, %s124, %s125
      %p129 = pneg %p123
      %p130 = scmp.eq.s32.totalorder %s22, 1
      %p131 = por %p129, %p130
      %p132 = scmp.ne.s32.totalorder %s124, %s127
      %p133 = scmp.eq.s32.totalorder %s22, 0
      %p134 = por %p132, %p133
      %p135 = scmp.ne.s32.totalorder %s124, %s127
      %p136 = scmp.eq.s32.totalorder %s27, 1
      %p137 = por %p135, %p136
      %p138 = scmp.ne.s32.totalorder %s127, %s128
      %p139 = scmp.eq.s32.totalorder %s27, 0
      %p140 = por %p138, %p139
      %p141 = scmp.ne.s32.totalorder %s127, %s128
      %p142 = scmp.eq.s32.totalorder %s28, 1
      %p143 = por %p141, %p142
      %p145 = scmp.ne.s32.totalorder %s128, %s144
      %p146 = scmp.eq.s32.totalorder %s28, 0
      %p147 = por %p145, %p146
      %s149 = sadd.s32 %s148, 1
      %p152 = scmp.eq.s32.totalorder %s22, 1
      %p153 = scmp.ne.s32.totalorder %s148, %s150
      %p154 = scmp.eq.s32.totalorder %s22, 0
      %p155 = por %p153, %p154
      %p156 = scmp.ne.s32.totalorder %s148, %s150
      %p157 = scmp.eq.s32.totalorder %s27, 1
      %p158 = por %p156, %p157
      %p159 = scmp.ne.s32.totalorder %s150, %s151
      %p160 = scmp.eq.s32.totalorder %s27, 0
      %p161 = por %p159, %p160
      %p162 = scmp.ne.s32.totalorder %s150, %s151
      %p163 = scmp.eq.s32.totalorder %s28, 1
      %p164 = por %p162, %p163
      %p166 = scmp.ne.s32.totalorder %s151, %s165
      %p167 = scmp.eq.s32.totalorder %s28, 0
      %p168 = por %p166, %p167
      %s170 = sadd.s32 %s169, 1
      %p173 = scmp.eq.s32.totalorder %s22, 1
      %p174 = scmp.ne.s32.totalorder %s169, %s171
      %p175 = scmp.eq.s32.totalorder %s22, 0
      %p176 = por %p174, %p175
      %p177 = scmp.ne.s32.totalorder %s169, %s171
      %p178 = scmp.eq.s32.totalorder %s27, 1
      %p179 = por %p177, %p178
      %p180 = scmp.ne.s32.totalorder %s171, %s172
      %p181 = scmp.eq.s32.totalorder %s27, 0
      %p182 = por %p180, %p181
      %p183 = scmp.ne.s32.totalorder %s171, %s172
      %p184 = scmp.eq.s32.totalorder %s28, 1
      %p185 = por %p183, %p184
      %p187 = scmp.ne.s32.totalorder %s172, %s186
      %p188 = scmp.eq.s32.totalorder %s28, 0
      %p189 = por %p187, %p188
      %s191 = sadd.s32 %s190, 1
      %p194 = scmp.eq.s32.totalorder %s22, 1
      %p195 = scmp.ne.s32.totalorder %s190, %s192
      %p196 = scmp.eq.s32.totalorder %s22, 0
      %p197 = por %p195, %p196
      %p198 = scmp.ne.s32.totalorder %s190, %s192
      %p199 = scmp.eq.s32.totalorder %s27, 1
      %p200 = por %p198, %p199
      %p201 = scmp.ne.s32.totalorder %s192, %s193
      %p202 = scmp.eq.s32.totalorder %s27, 0
      %p203 = por %p201, %p202
      %p204 = scmp.ne.s32.totalorder %s192, %s193
      %p205 = scmp.eq.s32.totalorder %s28, 1
      %p206 = por %p204, %p205
      %p208 = scmp.ne.s32.totalorder %s193, %s207
      %p209 = scmp.eq.s32.totalorder %s28, 0
      %p210 = por %p208, %p209
      %s211 = ssub.s32 %s29, %s41
      %s212 = ssub.s32 %s30, %s37
      %s213 = sor.u32 %s211, %s212
      %p214 = scmp.eq.s32.totalorder %s213, 0
      %s216 = sadd.s32 %s215, 1
      %s217 = scalar_select %p214, %s215, %s216
      %p220 = pneg %p214
      %p221 = scmp.eq.s32.totalorder %s22, 1
      %p222 = por %p220, %p221
      %p223 = scmp.ne.s32.totalorder %s215, %s218
      %p224 = scmp.eq.s32.totalorder %s22, 0
      %p225 = por %p223, %p224
      %p226 = scmp.ne.s32.totalorder %s215, %s218
      %p227 = scmp.eq.s32.totalorder %s27, 1
      %p228 = por %p226, %p227
      %p229 = scmp.ne.s32.totalorder %s218, %s219
      %p230 = scmp.eq.s32.totalorder %s27, 0
      %p231 = por %p229, %p230
      %p232 = scmp.ne.s32.totalorder %s218, %s219
      %p233 = scmp.eq.s32.totalorder %s28, 1
      %p234 = por %p232, %p233
      %p236 = scmp.ne.s32.totalorder %s219, %s235
      %p237 = scmp.eq.s32.totalorder %s28, 0
      %p238 = por %p236, %p237
      %s239 = ssub.s32 %s29, %s41
      %s240 = ssub.s32 %s30, %s37
      %s241 = sor.u32 %s239, %s240
      %p242 = scmp.eq.s32.totalorder %s241, 0
      %s244 = sadd.s32 %s243, 1
      %s245 = scalar_select %p242, %s243, %s244
      %p248 = pneg %p242
      %p249 = scmp.eq.s32.totalorder %s22, 1
      %p250 = por %p248, %p249
      %p251 = scmp.ne.s32.totalorder %s243, %s246
      %p252 = scmp.eq.s32.totalorder %s22, 0
      %p253 = por %p251, %p252
      %p254 = scmp.ne.s32.totalorder %s243, %s246
      %p255 = scmp.eq.s32.totalorder %s27, 1
      %p256 = por %p254, %p255
      %p257 = scmp.ne.s32.totalorder %s246, %s247
      %p258 = scmp.eq.s32.totalorder %s27, 0
      %p259 = por %p257, %p258
      %p260 = scmp.ne.s32.totalorder %s246, %s247
      %p261 = scmp.eq.s32.totalorder %s28, 1
      %p262 = por %p260, %p261
      %p264 = scmp.ne.s32.totalorder %s247, %s263
      %p265 = scmp.eq.s32.totalorder %s28, 0
      %p266 = por %p264, %p265
      %s267 = ssub.s32 %s29, %s41
      %s268 = ssub.s32 %s30, %s37
      %s269 = sor.u32 %s267, %s268
      %p270 = scmp.eq.s32.totalorder %s269, 0
      %s272 = sadd.s32 %s271, 1
      %s273 = scalar_select %p270, %s271, %s272
      %p276 = pneg %p270
      %p277 = scmp.eq.s32.totalorder %s22, 1
      %p278 = por %p276, %p277
      %p279 = scmp.ne.s32.totalorder %s271, %s274
      %p280 = scmp.eq.s32.totalorder %s22, 0
      %p281 = por %p279, %p280
      %p282 = scmp.ne.s32.totalorder %s271, %s274
      %p283 = scmp.eq.s32.totalorder %s27, 1
      %p284 = por %p282, %p283
      %p285 = scmp.ne.s32.totalorder %s274, %s275
      %p286 = scmp.eq.s32.totalorder %s27, 0
      %p287 = por %p285, %p286
      %p288 = scmp.ne.s32.totalorder %s274, %s275
      %p289 = scmp.eq.s32.totalorder %s28, 1
      %p290 = por %p288, %p289
      %p292 = scmp.ne.s32.totalorder %s275, %s291
      %p293 = scmp.eq.s32.totalorder %s28, 0
      %p294 = por %p292, %p293
      %p295 = scmp.le.s32.totalorder 1, %s22
      %p296 = scmp.lt.s32.totalorder %s22, 3
      %p297 = pnand %p295, %p296
      %p298 = pneg %p297
      // Predicated region
      $region9: #{tpu_custom_call.1} parent=5 // pred_check
        _
      $region10: #{tpu_custom_call.1} parent=5 // pred_check_branch
        %300 = sbr.rel (%p297) target = $region12
      $region11: #{tpu_custom_call.1} parent=5 // pred_region
        %s301 = ssub.s32 %s22, 1
        // Predicated region
        $region13: #{tpu_custom_call.1} parent=11 // pred_check
          %p302 = pneg %p161
        $region14: #{tpu_custom_call.1} parent=11 // pred_check_branch
          %304 = sbr.rel (%p302) target = $region16
        $region15: #{tpu_custom_call.1} parent=11 // pred_region
          _
        $region16: #{tpu_custom_call.1} parent=11 // pred_fallthru
          _
        // Predicated region
        $region17: #{tpu_custom_call.1} parent=11 // pred_check
          %p305 = pneg %p182
        $region18: #{tpu_custom_call.1} parent=11 // pred_check_branch
          %307 = sbr.rel (%p305) target = $region20
        $region19: #{tpu_custom_call.1} parent=11 // pred_region
          _
        $region20: #{tpu_custom_call.1} parent=11 // pred_fallthru
          _
        // Predicated region
        $region21: #{tpu_custom_call.1} parent=11 // pred_check
          %p308 = pneg %p203
        $region22: #{tpu_custom_call.1} parent=11 // pred_check_branch
          %310 = sbr.rel (%p308) target = $region24
        $region23: #{tpu_custom_call.1} parent=11 // pred_region
          _
        $region24: #{tpu_custom_call.1} parent=11 // pred_fallthru
          _
      $region12: #{tpu_custom_call.1} parent=5 // pred_fallthru
        _
      %p311 = scmp.lt.s32.totalorder %s22, 2
      // Predicated region
      $region25: #{tpu_custom_call.1} parent=5 // pred_check
        %p312 = pneg %p311
      $region26: #{tpu_custom_call.1} parent=5 // pred_check_branch
        %314 = sbr.rel (%p312) target = $region28
      $region27: #{tpu_custom_call.1} parent=5 // pred_region
        // Predicated region
        $region29: #{tpu_custom_call.1} parent=27 // pred_check
          %p315 = pneg %p56
        $region30: #{tpu_custom_call.1} parent=27 // pred_check_branch
          %317 = sbr.rel (%p315) target = $region32
        $region31: #{tpu_custom_call.1} parent=27 // pred_region
          %s318 = smul.u32 2, %s30
          %p319 = scmp.lt.s32.totalorder %s29, 1
          %s320 = scalar_select %p319, %s29, 1
          %p321 = scmp.lt.s32.totalorder %s318, 1
          %s322 = scalar_select %p321, %s318, 1
          %s323 = smul.addr %s320, 6
          %s324 = sadd.s32 %s322, %s323
          %s325 = smul.addr %s324, 4
          %s326 = scalar_lea.vmem %s0, %s325
          %s327 = smul.u32 2, %s30
        $region32: #{tpu_custom_call.1} parent=27 // pred_fallthru
          _
        // Predicated region
        $region33: #{tpu_custom_call.1} parent=27 // pred_check
          %p328 = pneg %p82
        $region34: #{tpu_custom_call.1} parent=27 // pred_check_branch
          %330 = sbr.rel (%p328) target = $region36
        $region35: #{tpu_custom_call.1} parent=27 // pred_region
          %p331 = scmp.lt.s32.totalorder %s29, 1
          %s332 = scalar_select %p331, %s29, 1
          %s333 = smul.addr %s332, 4
          %s334 = smul.addr %s333, 4
          %s335 = scalar_lea.vmem %s1, %s334
        $region36: #{tpu_custom_call.1} parent=27 // pred_fallthru
          _
        // Predicated region
        $region37: #{tpu_custom_call.1} parent=27 // pred_check
          %p336 = pneg %p108
        $region38: #{tpu_custom_call.1} parent=27 // pred_check_branch
          %338 = sbr.rel (%p336) target = $region40
        $region39: #{tpu_custom_call.1} parent=27 // pred_region
          %p339 = scmp.lt.s32.totalorder %s29, 1
          %s340 = scalar_select %p339, %s29, 1
          %s341 = smul.addr %s340, 4
          %s342 = smul.addr %s341, 4
          %s343 = scalar_lea.vmem %s2, %s342
        $region40: #{tpu_custom_call.1} parent=27 // pred_fallthru
          _
        // Predicated region
        $region41: #{tpu_custom_call.1} parent=27 // pred_check
          %p344 = pneg %p134
        $region42: #{tpu_custom_call.1} parent=27 // pred_check_branch
          %346 = sbr.rel (%p344) target = $region44
        $region43: #{tpu_custom_call.1} parent=27 // pred_region
          %p347 = scmp.lt.s32.totalorder %s29, 1
          %s348 = scalar_select %p347, %s29, 1
          %s349 = smul.addr %s348, 4
          %s350 = scalar_lea.vmem %s3, %s349
        $region44: #{tpu_custom_call.1} parent=27 // pred_fallthru
          _
        // Predicated region
        $region45: #{tpu_custom_call.1} parent=27 // pred_check
          %p351 = pneg %p225
        $region46: #{tpu_custom_call.1} parent=27 // pred_check_branch
          %353 = sbr.rel (%p351) target = $region48
        $region47: #{tpu_custom_call.1} parent=27 // pred_region
          %s354 = smul.u32 2, %s30
          %p355 = scmp.lt.s32.totalorder %s29, 1
          %s356 = scalar_select %p355, %s29, 1
          %p357 = scmp.lt.s32.totalorder %s354, 1
          %s358 = scalar_select %p357, %s354, 1
          %s359 = smul.addr %s356, 2
          %s360 = sadd.s32 %s358, %s359
          %s361 = smul.addr %s360, 2
          %s362 = scalar_lea.vmem %s7, %s361
          %s363 = smul.u32 2, %s30
        $region48: #{tpu_custom_call.1} parent=27 // pred_fallthru
          _
      $region28: #{tpu_custom_call.1} parent=5 // pred_fallthru
        _
      %p364 = scmp.le.s32.totalorder 1, %s22
      %p365 = scmp.lt.s32.totalorder %s22, 3
      %p366 = pnand %p364, %p365
      %p367 = pneg %p366
      // Predicated region
      $region49: #{tpu_custom_call.1} parent=5 // pred_check
        _
      $region50: #{tpu_custom_call.1} parent=5 // pred_check_branch
        %369 = sbr.rel (%p366) target = $region52
      $region51: #{tpu_custom_call.1} parent=5 // pred_region
        %s370 = ssub.s32 %s22, 1
        %s371 = smul.u32 2, %s32
        %p372 = scmp.lt.s32.totalorder %s31, 1
        %s373 = scalar_select %p372, %s31, 1
        %p374 = scmp.lt.s32.totalorder %s371, 1
        %s375 = scalar_select %p374, %s371, 1
        %s376 = smul.addr %s373, 6
        %s377 = sadd.s32 %s375, %s376
        %s378 = smul.addr %s377, 4
        %s379 = scalar_lea.vmem %s0, %s378
        %p380 = pneg %p62
        %p381 = pneg %p59
        %p382 = scmp.lt.s32.totalorder %s31, 1
        %s383 = scalar_select %p382, %s31, 1
        %s384 = smul.addr %s383, 4
        %s385 = smul.addr %s384, 4
        %s386 = scalar_lea.vmem %s1, %s385
        %p387 = pneg %p88
        %p388 = pneg %p85
        %p389 = scmp.lt.s32.totalorder %s31, 1
        %s390 = scalar_select %p389, %s31, 1
        %s391 = smul.addr %s390, 4
        %s392 = smul.addr %s391, 4
        %s393 = scalar_lea.vmem %s2, %s392
        %p394 = pneg %p114
        %p395 = pneg %p111
        %p396 = scmp.lt.s32.totalorder %s31, 1
        %s397 = scalar_select %p396, %s31, 1
        %s398 = smul.addr %s397, 4
        %s399 = scalar_lea.vmem %s3, %s398
        %p400 = pneg %p140
        %p401 = pneg %p137
        %p402 = pneg %p161
        %p403 = pneg %p158
        %p404 = pneg %p182
        %p405 = pneg %p179
        %p406 = pneg %p203
        %p407 = pneg %p200
        %s408 = smul.u32 2, %s32
        %p409 = scmp.lt.s32.totalorder %s31, 1
        %s410 = scalar_select %p409, %s31, 1
        %p411 = scmp.lt.s32.totalorder %s408, 1
        %s412 = scalar_select %p411, %s408, 1
        %s413 = smul.addr %s410, 2
        %s414 = sadd.s32 %s412, %s413
        %s415 = smul.addr %s414, 2
        %s416 = scalar_lea.vmem %s7, %s415
        %p417 = pneg %p231
        %p418 = pneg %p228
        %p419 = pneg %p259
        %p420 = pneg %p256
        %s421 = sand.u32 %s246, 1
        %s422 = scalar_lea.sflag [#allocation3], %s421
        %s423 = sand.u32 %s246, 1
        %s424 = smul.addr %s423, 32
        %s425 = scalar_lea.vmem [#allocation2], %s424
        %p426 = pneg %p287
        %p427 = pneg %p284
        %s428 = sand.u32 %s274, 1
        %s429 = scalar_lea.sflag [#allocation5], %s428
        %s430 = sand.u32 %s274, 1
        %s431 = smul.addr %s430, 16
        %s432 = scalar_lea.vmem [#allocation4], %s431
        %s433 = smul.u32 2, %s32
        %p434 = scmp.lt.s32.totalorder %s31, 1
        %s435 = scalar_select %p434, %s31, 1
        %p436 = scmp.lt.s32.totalorder %s433, 1
        %s437 = scalar_select %p436, %s433, 1
        %s438 = smul.addr %s435, 6
        %s439 = sadd.s32 %s437, %s438
        %s440 = smul.addr %s439, 4
        %s441 = scalar_lea.vmem %s0, %s440
        %s442 = smul.u32 2, %s32
        %p443 = scmp.lt.s32.totalorder %s31, 1
        %s444 = scalar_select %p443, %s31, 1
        %s445 = smul.addr %s444, 4
        %s446 = smul.addr %s445, 4
        %s447 = scalar_lea.vmem %s1, %s446
        %p448 = scmp.lt.s32.totalorder %s31, 1
        %s449 = scalar_select %p448, %s31, 1
        %s450 = smul.addr %s449, 4
        %s451 = smul.addr %s450, 4
        %s452 = scalar_lea.vmem %s2, %s451
        %p453 = scmp.lt.s32.totalorder %s31, 1
        %s454 = scalar_select %p453, %s31, 1
        %s455 = smul.addr %s454, 4
        %s456 = scalar_lea.vmem %s3, %s455
        %s457 = smul.u32 2, %s32
        %p458 = scmp.lt.s32.totalorder %s31, 1
        %s459 = scalar_select %p458, %s31, 1
        %p460 = scmp.lt.s32.totalorder %s457, 1
        %s461 = scalar_select %p460, %s457, 1
        %s462 = smul.addr %s459, 2
        %s463 = sadd.s32 %s461, %s462
        %s464 = smul.addr %s463, 2
        %s465 = scalar_lea.vmem %s7, %s464
        %s466 = smul.u32 2, %s32
        %s467 = smul.u32 2, %s32
        %s468 = smul.u32 2, %s32
        %v470 = vld [vmem:[%s447] sm:$0xf]
        %v471 = vld [vmem:[%s447 + $0x4] sm:$0xf]
        %v472 = vld [vmem:[%s447 + $0x8] sm:$0xf]
        %v473 = vld [vmem:[%s447 + $0xc] sm:$0xf]
        %v474 = vld [vmem:[%s441] sm:$0xff]
        %v475 = vld [vmem:[%s441 + $0x8] sm:$0xff]
        %v476 = vld [vmem:[%s441 + $0x10] sm:$0x33]
        %v477 = vld [vmem:[%s465] ss:$2 sm:$0x3]
        %v479 = vlaneseq
        %v480 = vshrl.u32 %v479, 7
        %v481 = vsub.s32 0, %v480
        %v482 = vrot.slane %v477, %v481
        %v483 = vlaneseq
        %v484 = vshrl.u32 %v483, 7
        %v485 = vsub.s32 1, %v484
        %v486 = vrot.slane %v477, %v485
        %v493 = vunpack.c.l.b16 %v470
        %v494 = vunpack.c.l.b16 %v471
        %v495 = vunpack.c.l.b16 %v472
        %v496 = vunpack.c.l.b16 %v473
        %v497 = vpack.c.b16 %v494, %v493
        %v498 = vpack.c.b16 %v496, %v495
        %v502 = vunpack.c.l.b16 %v474
        %v503 = vunpack.c.h.b16 %v474
        %v504 = vunpack.c.l.b16 %v475
        %v505 = vunpack.c.h.b16 %v475
        %v506 = vunpack.c.l.b16 %v476
        %v507 = vunpack.c.h.b16 %v476
        %v508 = vpack.c.b16 %v504, %v502
        %v509 = vpack.c.b16 %v505, %v503
        %v510 = vpack.c.b16 %v506, %v506
        %v511 = vpack.c.b16 %v507, %v507
        %vm514 = vcmask 162816
        %v516 = vsel %vm514, %v497, 0
        %v519 = vsel %vm514, %v498, 0
        %vm521 = vcmask 1041408
        %v523 = vsel %vm521, %v510, 0
        %v526 = vsel %vm521, %v511, 0
        %528 = vmatprep.subr.bf16.mxu0 %v509
        %529 = vmatpush1.bf16.msra.mxu0 %v508
        %530 = vmatprep.subr.bf16.mxu0 %v526
        %531 = vmatpush1.bf16.msra.mxu0 %v523
        %532 = vmatprep.subr.bf16.mxu0 0
        %533 = vmatpush1.bf16.msra.mxu0 0
        %534 = vmatprep.subr.bf16.mxu0 0
        %535 = vmatpush1.bf16.msra.mxu0 0
        %536 = vmatprep.subr.bf16.mxu0 0
        %537 = vmatpush1.bf16.msra.mxu0 0
        %538 = vmatprep.subr.bf16.mxu0 0
        %539 = vmatpush1.bf16.msra.mxu0 0
        %540 = vmatprep.subr.bf16.mxu0 0
        %541 = vmatpush1.bf16.msra.mxu0 0
        %542 = vmatprep.subr.bf16.mxu0 0
        %543 = vmatpush1.bf16.msra.mxu0 0
        %544 = vmatprep.subr.bf16.mxu0 0
        %545 = vmatpush1.bf16.msra.mxu0 0
        %546 = vmatprep.subr.bf16.mxu0 0
        %547 = vmatpush1.bf16.msra.mxu0 0
        %548 = vmatprep.subr.bf16.mxu0 0
        %549 = vmatpush1.bf16.msra.mxu0 0
        %550 = vmatprep.subr.bf16.mxu0 0
        %551 = vmatpush1.bf16.msra.mxu0 0
        %552 = vmatprep.subr.bf16.mxu0 0
        %553 = vmatpush1.bf16.msra.mxu0 0
        %554 = vmatprep.subr.bf16.mxu0 0
        %555 = vmatpush1.bf16.msra.mxu0 0
        %556 = vmatprep.subr.bf16.mxu0 0
        %557 = vmatpush1.bf16.msra.mxu0 0
        %558 = vmatprep.subr.bf16.mxu0 0
        %559 = vmatpush1.bf16.msra.mxu0 0
        %560 = vmatprep.mubr.bf16.mxu0 0
        %561 = vmatmul.mubr.bf16.gmra.mrb[0].mxu0 %v516
        %v562 = vpop.f32.mrb[0].mxu0
        %v563 = vadd.f32 %v482, %v562
        %v564 = vpop.f32.mrb[0].mxu0
        %v565 = vadd.f32 %v486, %v564
        %v566 = vpop.f32.mrb[0].mxu0
        %v567 = vadd.f32 %v482, %v566
        %v568 = vpop.f32.mrb[0].mxu0
        %v569 = vadd.f32 %v486, %v568
        %570 = vmatprep.mubr.bf16.mxu0 0
        %571 = vmatmul.mubr.bf16.gmra.mrb[0].mxu0 %v519
        %v572 = vpop.f32.mrb[0].mxu0
        %v573 = vadd.f32 %v482, %v572
        %v574 = vpop.f32.mrb[0].mxu0
        %v575 = vadd.f32 %v486, %v574
        %v576 = vpop.f32.mrb[0].mxu0
        %v577 = vadd.f32 %v482, %v576
        %v578 = vpop.f32.mrb[0].mxu0
        %v579 = vadd.f32 %v486, %v578
        %580 = vdwg.mxu0
        %v581 = vld [vmem:[%s4] sm:$0xff]
        %v582 = vld [vmem:[%s4 + $0x8] sm:$0xff]
        %v583 = vld [vmem:[%s4 + $0x10] sm:$0xff]
        %v584 = vld [vmem:[%s4 + $0x18] sm:$0xff]
        %586 = vset.pattern.permute.xlu0 0
        %587 = vperm.xlu0 %586, %v581
        %v588 = vpop.permute.xlu0 %587
        %591 = vset.pattern.permute.xlu0 0
        %592 = vperm.xlu0 %591, %v582
        %v593 = vpop.permute.xlu0 %592
        %596 = vset.pattern.permute.xlu0 0
        %597 = vperm.xlu0 %596, %v583
        %v598 = vpop.permute.xlu0 %597
        %601 = vset.pattern.permute.xlu0 0
        %602 = vperm.xlu0 %601, %v584
        %v603 = vpop.permute.xlu0 %602
        %v605 = vadd.f32 %v563, %v588
        %v606 = vadd.f32 %v565, %v588
        %v607 = vadd.f32 %v567, %v593
        %v608 = vadd.f32 %v569, %v593
        %v609 = vadd.f32 %v573, %v598
        %v610 = vadd.f32 %v575, %v598
        %v611 = vadd.f32 %v577, %v603
        %v612 = vadd.f32 %v579, %v603
        %v613 = vmul.f32 %v605, 0.2
        %v614 = vmul.f32 %v606, 0.2
        %v615 = vmul.f32 %v607, 0.2
        %v616 = vmul.f32 %v608, 0.2
        %v617 = vmul.f32 %v609, 0.2
        %v618 = vmul.f32 %v610, 0.2
        %v619 = vmul.f32 %v611, 0.2
        %v620 = vmul.f32 %v612, 0.2
        %v621 = vmax.f32 %v605, %v613
        %v622 = vmax.f32 %v606, %v614
        %v623 = vmax.f32 %v607, %v615
        %v624 = vmax.f32 %v608, %v616
        %v625 = vmax.f32 %v609, %v617
        %v626 = vmax.f32 %v610, %v618
        %v627 = vmax.f32 %v611, %v619
        %v628 = vmax.f32 %v612, %v620
        %v629 = vld [vmem:[%s452] sm:$0xf]
        %v630 = vld [vmem:[%s452 + $0x4] sm:$0xf]
        %v631 = vld [vmem:[%s452 + $0x8] sm:$0xf]
        %v632 = vld [vmem:[%s452 + $0xc] sm:$0xf]
        %v633 = vpack.c.bf16 %v623, %v621
        %v634 = vpack.c.bf16 %v624, %v622
        %v635 = vpack.c.bf16 %v627, %v625
        %v636 = vpack.c.bf16 %v628, %v626
        %s637 = scalar_lea.vmem %s465, 1
        %v638 = vld [vmem:[%s637] ss:$2 sm:$0x3]
        %v640 = vlaneseq
        %v641 = vshrl.u32 %v640, 7
        %v642 = vsub.s32 0, %v641
        %v643 = vrot.slane %v638, %v642
        %v644 = vlaneseq
        %v645 = vshrl.u32 %v644, 7
        %v646 = vsub.s32 1, %v645
        %v647 = vrot.slane %v638, %v646
        %v654 = vunpack.c.l.b16 %v629
        %v655 = vunpack.c.l.b16 %v630
        %v656 = vunpack.c.l.b16 %v631
        %v657 = vunpack.c.l.b16 %v632
        %v658 = vpack.c.b16 %v655, %v654
        %v659 = vpack.c.b16 %v657, %v656
        %vm660 = vcmask 261120
        %v662 = vsel %vm660, %v658, 0
        %v665 = vsel %vm660, %v659, 0
        %667 = vmatprep.subr.bf16.mxu0 %v634
        %668 = vmatpush1.bf16.msra.mxu0 %v633
        %669 = vmatprep.subr.bf16.mxu0 %v636
        %670 = vmatpush1.bf16.msra.mxu0 %v635
        %671 = vmatprep.subr.bf16.mxu0 0
        %672 = vmatpush1.bf16.msra.mxu0 0
        %673 = vmatprep.subr.bf16.mxu0 0
        %674 = vmatpush1.bf16.msra.mxu0 0
        %675 = vmatprep.subr.bf16.mxu0 0
        %676 = vmatpush1.bf16.msra.mxu0 0
        %677 = vmatprep.subr.bf16.mxu0 0
        %678 = vmatpush1.bf16.msra.mxu0 0
        %679 = vmatprep.subr.bf16.mxu0 0
        %680 = vmatpush1.bf16.msra.mxu0 0
        %681 = vmatprep.subr.bf16.mxu0 0
        %682 = vmatpush1.bf16.msra.mxu0 0
        %683 = vmatprep.subr.bf16.mxu0 0
        %684 = vmatpush1.bf16.msra.mxu0 0
        %685 = vmatprep.subr.bf16.mxu0 0
        %686 = vmatpush1.bf16.msra.mxu0 0
        %687 = vmatprep.subr.bf16.mxu0 0
        %688 = vmatpush1.bf16.msra.mxu0 0
        %689 = vmatprep.subr.bf16.mxu0 0
        %690 = vmatpush1.bf16.msra.mxu0 0
        %691 = vmatprep.subr.bf16.mxu0 0
        %692 = vmatpush1.bf16.msra.mxu0 0
        %693 = vmatprep.subr.bf16.mxu0 0
        %694 = vmatpush1.bf16.msra.mxu0 0
        %695 = vmatprep.subr.bf16.mxu0 0
        %696 = vmatpush1.bf16.msra.mxu0 0
        %697 = vmatprep.subr.bf16.mxu0 0
        %698 = vmatpush1.bf16.msra.mxu0 0
        %699 = vmatprep.mubr.bf16.mxu0 0
        %700 = vmatmul.mubr.bf16.gmra.mrb[0].mxu0 %v662
        %v701 = vpop.f32.mrb[0].mxu0
        %v702 = vadd.f32 %v643, %v701
        %v703 = vpop.f32.mrb[0].mxu0
        %v704 = vadd.f32 %v647, %v703
        %v705 = vpop.f32.mrb[0].mxu0
        %v706 = vadd.f32 %v643, %v705
        %v707 = vpop.f32.mrb[0].mxu0
        %v708 = vadd.f32 %v647, %v707
        %709 = vmatprep.mubr.bf16.mxu0 0
        %710 = vmatmul.mubr.bf16.gmra.mrb[0].mxu0 %v665
        %v711 = vpop.f32.mrb[0].mxu0
        %v712 = vadd.f32 %v643, %v711
        %v713 = vpop.f32.mrb[0].mxu0
        %v714 = vadd.f32 %v647, %v713
        %v715 = vpop.f32.mrb[0].mxu0
        %v716 = vadd.f32 %v643, %v715
        %v717 = vpop.f32.mrb[0].mxu0
        %v718 = vadd.f32 %v647, %v717
        %719 = vdwg.mxu0
        %v720 = vld [vmem:[%s5] sm:$0xff]
        %v721 = vld [vmem:[%s5 + $0x8] sm:$0xff]
        %v722 = vld [vmem:[%s5 + $0x10] sm:$0xff]
        %v723 = vld [vmem:[%s5 + $0x18] sm:$0xff]
        %725 = vset.pattern.permute.xlu0 0
        %726 = vperm.xlu0 %725, %v720
        %v727 = vpop.permute.xlu0 %726
        %730 = vset.pattern.permute.xlu0 0
        %731 = vperm.xlu0 %730, %v721
        %v732 = vpop.permute.xlu0 %731
        %735 = vset.pattern.permute.xlu0 0
        %736 = vperm.xlu0 %735, %v722
        %v737 = vpop.permute.xlu0 %736
        %740 = vset.pattern.permute.xlu0 0
        %741 = vperm.xlu0 %740, %v723
        %v742 = vpop.permute.xlu0 %741
        %v744 = vadd.f32 %v702, %v727
        %v745 = vadd.f32 %v704, %v727
        %v746 = vadd.f32 %v706, %v732
        %v747 = vadd.f32 %v708, %v732
        %v748 = vadd.f32 %v712, %v737
        %v749 = vadd.f32 %v714, %v737
        %v750 = vadd.f32 %v716, %v742
        %v751 = vadd.f32 %v718, %v742
        %v752 = vmul.f32 %v744, 0.2
        %v753 = vmul.f32 %v745, 0.2
        %v754 = vmul.f32 %v746, 0.2
        %v755 = vmul.f32 %v747, 0.2
        %v756 = vmul.f32 %v748, 0.2
        %v757 = vmul.f32 %v749, 0.2
        %v758 = vmul.f32 %v750, 0.2
        %v759 = vmul.f32 %v751, 0.2
        %v760 = vmax.f32 %v744, %v752
        %v761 = vmax.f32 %v745, %v753
        %v762 = vmax.f32 %v746, %v754
        %v763 = vmax.f32 %v747, %v755
        %v764 = vmax.f32 %v748, %v756
        %v765 = vmax.f32 %v749, %v757
        %v766 = vmax.f32 %v750, %v758
        %v767 = vmax.f32 %v751, %v759
        %v768 = vmul.f32 %v760, 1.4142135
        %v769 = vmul.f32 %v761, 1.4142135
        %v770 = vmul.f32 %v762, 1.4142135
        %v771 = vmul.f32 %v763, 1.4142135
        %v772 = vmul.f32 %v764, 1.4142135
        %v773 = vmul.f32 %v765, 1.4142135
        %v774 = vmul.f32 %v766, 1.4142135
        %v775 = vmul.f32 %v767, 1.4142135
        %v776 = vpack.c.bf16 %v770, %v768
        %v777 = vpack.c.bf16 %v771, %v769
        %v778 = vpack.c.bf16 %v774, %v772
        %v779 = vpack.c.bf16 %v775, %v773
        %v784 = vunpack.c.l.b16 %v776
        %v785 = vunpack.c.l.b16 %v777
        %v786 = vunpack.c.h.b16 %v776
        %v787 = vunpack.c.h.b16 %v777
        %v788 = vunpack.c.l.b16 %v778
        %v789 = vunpack.c.l.b16 %v779
        %v790 = vunpack.c.h.b16 %v778
        %v791 = vunpack.c.h.b16 %v779
        %v792 = vpack.c.b16 %v785, %v784
        %v793 = vpack.c.b16 %v787, %v786
        %v794 = vpack.c.b16 %v789, %v788
        %v795 = vpack.c.b16 %v791, %v790
        %800 = vst [vmem:[%s425] sm:$0xff] %v792
        %801 = vst [vmem:[%s425 + $0x8] sm:$0xff] %v793
        %802 = vst [vmem:[%s425 + $0x10] sm:$0xff] %v794
        %803 = vst [vmem:[%s425 + $0x18] sm:$0xff] %v795
        %v804 = vld [vmem:[%s456] sm:$0xf]
        %v805 = vpack.c.bf16 %v762, %v760
        %v806 = vpack.c.bf16 %v763, %v761
        %v807 = vpack.c.bf16 %v766, %v764
        %v808 = vpack.c.bf16 %v767, %v765
        %v809 = vld [vmem:[%s6] sm:$0xff]
        %811 = vset.pattern.permute.xlu0 0
        %812 = vperm.xlu0 %811, %v809
        %v813 = vpop.permute.xlu0 %812
        %v816 = vsel %vm660, %v804, 0
        %818 = vmatprep.subr.bf16.mxu0 %v806
        %819 = vmatpush1.bf16.msra.mxu0 %v805
        %820 = vmatprep.subr.bf16.mxu0 %v808
        %821 = vmatpush1.bf16.msra.mxu0 %v807
        %822 = vmatprep.subr.bf16.mxu0 0
        %823 = vmatpush1.bf16.msra.mxu0 0
        %824 = vmatprep.subr.bf16.mxu0 0
        %825 = vmatpush1.bf16.msra.mxu0 0
        %826 = vmatprep.subr.bf16.mxu0 0
        %827 = vmatpush1.bf16.msra.mxu0 0
        %828 = vmatprep.subr.bf16.mxu0 0
        %829 = vmatpush1.bf16.msra.mxu0 0
        %830 = vmatprep.subr.bf16.mxu0 0
        %831 = vmatpush1.bf16.msra.mxu0 0
        %832 = vmatprep.subr.bf16.mxu0 0
        %833 = vmatpush1.bf16.msra.mxu0 0
        %834 = vmatprep.subr.bf16.mxu0 0
        %835 = vmatpush1.bf16.msra.mxu0 0
        %836 = vmatprep.subr.bf16.mxu0 0
        %837 = vmatpush1.bf16.msra.mxu0 0
        %838 = vmatprep.subr.bf16.mxu0 0
        %839 = vmatpush1.bf16.msra.mxu0 0
        %840 = vmatprep.subr.bf16.mxu0 0
        %841 = vmatpush1.bf16.msra.mxu0 0
        %842 = vmatprep.subr.bf16.mxu0 0
        %843 = vmatpush1.bf16.msra.mxu0 0
        %844 = vmatprep.subr.bf16.mxu0 0
        %845 = vmatpush1.bf16.msra.mxu0 0
        %846 = vmatprep.subr.bf16.mxu0 0
        %847 = vmatpush1.bf16.msra.mxu0 0
        %848 = vmatprep.subr.bf16.mxu0 0
        %849 = vmatpush1.bf16.msra.mxu0 0
        %850 = vmatprep.mubr.bf16.mxu0 0
        %851 = vmatmul.mubr.bf16.gmra.mrb[0].mxu0 %v816
        %v852 = vpop.f32.mrb[0].mxu0
        %v853 = vadd.f32 %v813, %v852
        %v854 = vpop.f32.mrb[0].mxu0
        %v855 = vadd.f32 %v813, %v854
        %v856 = vpop.f32.mrb[0].mxu0
        %v857 = vpop.f32.mrb[0].mxu0
        %858 = vdwg.mxu0
        %859 = vst [vmem:[%s432] sm:$0xff] %v853
        %860 = vst [vmem:[%s432 + $0x8] sm:$0xff] %v855
        %s861 = sand.u32 %s246, 1
        %s862 = scalar_lea.sflag [#allocation3], %s861
        %s863 = sand.u32 %s246, 1
        %s864 = smul.addr %s863, 32
        %s865 = scalar_lea.vmem [#allocation2], %s864
        %s866 = sand.u32 %s274, 1
        %s867 = scalar_lea.sflag [#allocation5], %s866
        %s868 = sand.u32 %s274, 1
        %s869 = smul.addr %s868, 16
        %s870 = scalar_lea.vmem [#allocation4], %s869
        // Predicated region
        $region53: #{tpu_custom_call.1} parent=51 // pred_check
          %p871 = pneg %p256
        $region54: #{tpu_custom_call.1} parent=51 // pred_check_branch
          %873 = sbr.rel (%p871) target = $region56
        $region55: #{tpu_custom_call.1} parent=51 // pred_region
          %s874 = smul.u32 2, %s32
          %s876 = ssub.s32 512, 512
          %877 = vsyncadd %s862, %s876
          %s878 = smul.addr %s31, 8
          %s879 = sadd.s32 %s874, %s878
          %s880 = smul.addr %s879, 64
          %s881 = scalar_lea.hbm %s8, %s880
          %s882 = sshll.u32 %s865, 4
          %s883 = int_to_ptr.vmem [resolvable:$true] %s882
          %888 = dma.vmem_to_hbm [thread:$0]  %s883, 512, %s881, %s862, 128, 128, 8
        $region56: #{tpu_custom_call.1} parent=51 // pred_fallthru
          _
        // Predicated region
        $region57: #{tpu_custom_call.1} parent=51 // pred_check
          %p889 = pneg %p284
        $region58: #{tpu_custom_call.1} parent=51 // pred_check_branch
          %891 = sbr.rel (%p889) target = $region60
        $region59: #{tpu_custom_call.1} parent=51 // pred_region
          %s892 = smul.u32 2, %s32
          %s894 = ssub.s32 256, 256
          %895 = vsyncadd %s867, %s894
          %s896 = smul.addr %s31, 2
          %s897 = sadd.s32 %s892, %s896
          %s898 = smul.addr %s897, 128
          %s899 = scalar_lea.hbm %s9, %s898
          %s901 = sshll.u32 %s870, 4
          %s902 = int_to_ptr.vmem [resolvable:$true] %s901
          %904 = dma.vmem_to_hbm [thread:$0]  %s902, 256, %s899, %s867
        $region60: #{tpu_custom_call.1} parent=51 // pred_fallthru
          _
      $region52: #{tpu_custom_call.1} parent=5 // pred_fallthru
        _
      %p905 = scmp.le.s32.totalorder 2, %s22
      // Predicated region
      $region61: #{tpu_custom_call.1} parent=5 // pred_check
        %p906 = pneg %p905
      $region62: #{tpu_custom_call.1} parent=5 // pred_check_branch
        %908 = sbr.rel (%p906) target = $region64
      $region63: #{tpu_custom_call.1} parent=5 // pred_region
        %s909 = ssub.s32 %s22, 2
        // Predicated region
        $region65: #{tpu_custom_call.1} parent=63 // pred_check
          %p910 = pneg %p262
        $region66: #{tpu_custom_call.1} parent=63 // pred_check_branch
          %912 = sbr.rel (%p910) target = $region68
        $region67: #{tpu_custom_call.1} parent=63 // pred_region
          %s913 = sand.u32 %s247, 1
          %s914 = scalar_lea.sflag [#allocation3], %s913
          %s915 = sand.u32 %s247, 1
          %s916 = smul.addr %s915, 32
          %s917 = scalar_lea.vmem [#allocation2], %s916
          %918 = dma.done %s914, 512
        $region68: #{tpu_custom_call.1} parent=63 // pred_fallthru
          _
        // Predicated region
        $region69: #{tpu_custom_call.1} parent=63 // pred_check
          %p919 = pneg %p290
        $region70: #{tpu_custom_call.1} parent=63 // pred_check_branch
          %921 = sbr.rel (%p919) target = $region72
        $region71: #{tpu_custom_call.1} parent=63 // pred_region
          %s922 = sand.u32 %s275, 1
          %s923 = scalar_lea.sflag [#allocation5], %s922
          %s924 = sand.u32 %s275, 1
          %s925 = smul.addr %s924, 16
          %s926 = scalar_lea.vmem [#allocation4], %s925
          %927 = dma.done %s923, 256
        $region72: #{tpu_custom_call.1} parent=63 // pred_fallthru
          _
      $region64: #{tpu_custom_call.1} parent=5 // pred_fallthru
        _
    $region6: #{tpu_custom_call.1} parent=1 // loop_footer
      %s26 = sadd.s32 1, %s22
    $region7: #{tpu_custom_call.1} parent=1 // loop_footer_branch
      %21 = sbr.rel target = $region3
    $region8: #{tpu_custom_call.1} parent=1 // loop_exit
      _
    %928 = vsyncpa [#allocation3], 1
    %s929 = scalar_lea.sflag [#allocation3], 1
    %930 = vsyncpa %s929, 1
    %931 = vsyncpa [#allocation5], 1
    %s932 = scalar_lea.sflag [#allocation5], 1
    %933 = vsyncpa %s932, 1

</llo_original>
